<compile_context>
chip_gen: v5e
topology: v5e:2x2
jax: 0.10.0
libtpu: 0.0.40
codegen_flags: <defaults>
</compile_context>

<pallas_src>
import numpy as np
import jax
import jax.numpy as jnp
from jax.experimental import pallas as pl
from jax.experimental.pallas import tpu as pltpu

_MXU_K = 256          # v6e/v7x MXU contraction width; K=256 also splits fine on v5e
_MAX_GROUPS = 8       # bound on the static per-block group unroll
_MIN_STEPS = 4        # >= 2 grid steps per TensorCore on v7x megacore


# ---------------------------------------------------------------------------
# 1-D operator construction
# ---------------------------------------------------------------------------
def _get_filter_1d(filt_size):
    table = {
        1: [1.0],
        2: [1.0, 1.0],
        3: [1.0, 2.0, 1.0],
        4: [1.0, 3.0, 3.0, 1.0],
        5: [1.0, 4.0, 6.0, 4.0, 1.0],
        6: [1.0, 5.0, 10.0, 10.0, 5.0, 1.0],
        7: [1.0, 6.0, 15.0, 20.0, 15.0, 6.0, 1.0],
    }
    return np.array(table[filt_size], dtype=np.float64)


def _upsample_matrix_1d(L, filt_size=4, stride=2):
    """(2L, L) matrix of the 1-D replicate-pad + conv_transpose(stride=2) + crop op."""
    a = _get_filter_1d(filt_size)
    f1 = a / a.sum() * stride                  # [0.25, 0.75, 0.75, 0.25]
    we0, we1 = float(f1[3]), float(f1[1])      # even-phase taps on x[q-1], x[q]
    wo1, wo2 = float(f1[2]), float(f1[0])      # odd-phase  taps on x[q],   x[q+1]
    A = np.zeros((2 * L, L), dtype=np.float32)
    for q in range(L):
        A[2 * q, max(q - 1, 0)] += we0
        A[2 * q, q] += we1
        A[2 * q + 1, q] += wo1
        A[2 * q + 1, min(q + 1, L - 1)] += wo2
    return A


# ---------------------------------------------------------------------------
# Tiling / VMEM budgeting
# ---------------------------------------------------------------------------
def _vmem_budget_bytes():
    """(block_budget, vmem_limit) tuned to the chip's VMEM capacity."""
    cap = 128 * 1024 * 1024
    try:
        info = pltpu.get_tpu_info()
        cap = int(getattr(info, "vmem_capacity_bytes", cap))
    except Exception:
        pass
    if cap <= 64 * 1024 * 1024:                       # v7x-class: 64 MiB per TC
        return 28 * 1024 * 1024, 44 * 1024 * 1024
    return 64 * 1024 * 1024, 100 * 1024 * 1024        # v5e / v6e: 128 MiB


def _pick_tiling(P, H, W, in_bytes, out_bytes, comp_bytes, block_budget):
    """Choose (tile_p planes per block, g planes per packed H-pass group)."""
    g = max(1, min(P, _MXU_K // max(H, 1)))
    # constants (block-diag A_H and A_W^T), default double-buffered
    a_bytes = 2 * ((2 * g * H) * (g * H) + W * (2 * W)) * comp_bytes
    budget = max(block_budget - a_bytes, 1)
    # double-buffered in/out blocks + H-pass staging scratch, per plane
    per_plane = (2 * H * W * in_bytes
                 + 2 * (2 * H) * (2 * W) * out_bytes
                 + (2 * H) * W * comp_bytes)
    cap = max(1, budget // per_plane)
    cap = min(cap, g * _MAX_GROUPS)
    if P >= _MIN_STEPS:                               # keep pipelining per core
        cap = min(cap, max(1, P // _MIN_STEPS))
    tile_p = max(1, min(cap, P))
    if tile_p >= g:
        tile_p = (tile_p // g) * g                    # whole groups per block
    else:
        g = tile_p
    return tile_p, g


# ---------------------------------------------------------------------------
# Kernel
# ---------------------------------------------------------------------------
def _make_kernel(tile_p, g, H, W, compute_dtype):
    n_groups = tile_p // g
    gH2 = 2 * g * H

    def h_pass(ahg, x_ref, grp):
        # (g, H, W) -> (g*H, W): leading-dim merge (layout-free when H % 8 == 0)
        xg = x_ref[pl.ds(grp * g, g)].reshape(g * H, W)
        if xg.dtype != compute_dtype:
            xg = xg.astype(compute_dtype)
        # packed K ≈ MXU width contraction, f32 accumulate
        return jnp.dot(ahg, xg, preferred_element_type=jnp.float32)   # (2gH, W)

    if n_groups == 1:
        def kernel(ahg_ref, awt_ref, x_ref, o_ref):
            ahg = ahg_ref[...]                                        # (2gH, gH)
            awt = awt_ref[...]                                        # (W, 2W)
            hg = h_pass(ahg, x_ref, 0).astype(compute_dtype)          # (tile_p*2H, W)
            y = jnp.dot(hg, awt, preferred_element_type=jnp.float32)  # (tile_p*2H, 2W)
            o_ref[...] = y.reshape(tile_p, 2 * H, 2 * W).astype(o_ref.dtype)
    else:
        def kernel(ahg_ref, awt_ref, x_ref, o_ref, h_scr):
            ahg = ahg_ref[...]
            awt = awt_ref[...]
            for grp in range(n_groups):                # small static unroll (<= 8)
                h_scr[pl.ds(grp * gH2, gH2), :] = (
                    h_pass(ahg, x_ref, grp).astype(compute_dtype))
            # one large-M W-pass matmul over all planes in the block + one store
            y = jnp.dot(h_scr[...], awt, preferred_element_type=jnp.float32)
            o_ref[...] = y.reshape(tile_p, 2 * H, 2 * W).astype(o_ref.dtype)

    return kernel


# ---------------------------------------------------------------------------
# Wrapper
# ---------------------------------------------------------------------------
def upsample_pallas(x, *, filt_size=4, stride=2, pad_type="repl"):
    """Pallas implementation of Upsample(channels, 'repl', filt_size=4, stride=2)."""
    assert filt_size == 4 and stride == 2, "kernel specialized to module defaults"
    assert pad_type in ("repl", "replicate")
    N, C, H, W = x.shape
    P = N * C
    xf = x.reshape(P, H, W)                           # leading-dim reshape, free

    compute_dtype = jnp.bfloat16 if x.dtype == jnp.bfloat16 else jnp.float32
    in_bytes = jnp.dtype(x.dtype).itemsize
    comp_bytes = jnp.dtype(compute_dtype).itemsize

    block_budget, vmem_limit = _vmem_budget_bytes()
    tile_p, g = _pick_tiling(P, H, W, in_bytes, in_bytes, comp_bytes, block_budget)
    n_groups = tile_p // g

    n_steps = -(-P // tile_p)                         # cdiv
    P_pad = n_steps * tile_p
    if P_pad > P:                                     # ragged N*C: pad plane axis
        xf = jnp.concatenate(
            [xf, jnp.zeros((P_pad - P, H, W), dtype=x.dtype)], axis=0)

    # operator matrices (taps 0.25/0.75 are exact in bf16)
    A_h = _upsample_matrix_1d(H, filt_size, stride)               # (2H, H)
    A_hg = np.zeros((2 * g * H, g * H), dtype=np.float32)         # block-diag over g
    for j in range(g):
        A_hg[j * 2 * H:(j + 1) * 2 * H, j * H:(j + 1) * H] = A_h
    A_hg = jnp.asarray(A_hg, dtype=compute_dtype)
    A_wT = jnp.asarray(_upsample_matrix_1d(W, filt_size, stride).T,
                       dtype=compute_dtype)                       # (W, 2W)

    scratch_shapes = []
    if n_groups > 1:
        scratch_shapes.append(pltpu.VMEM((tile_p * 2 * H, W), compute_dtype))

    out = pl.pallas_call(
        _make_kernel(tile_p, g, H, W, compute_dtype),
        out_shape=jax.ShapeDtypeStruct((P_pad, 2 * H, 2 * W), x.dtype),
        grid_spec=pltpu.PrefetchScalarGridSpec(
            num_scalar_prefetch=0,
            grid=(n_steps,),
            in_specs=[
                pl.BlockSpec((2 * g * H, g * H), lambda i: (0, 0)),   # A_H (block-diag)
                pl.BlockSpec((W, 2 * W), lambda i: (0, 0)),           # A_W^T
                pl.BlockSpec((tile_p, H, W), lambda i: (i, 0, 0)),
            ],
            out_specs=pl.BlockSpec((tile_p, 2 * H, 2 * W), lambda i: (i, 0, 0)),
            scratch_shapes=tuple(scratch_shapes),
        ),
        compiler_params=pltpu.CompilerParams(
            dimension_semantics=("parallel",),
            vmem_limit_bytes=vmem_limit,
        ),
        cost_estimate=pl.CostEstimate(
            flops=int(P) * (4 * H * H * W + 8 * H * W * W),
            transcendentals=0,
            bytes_accessed=5 * int(P) * H * W * in_bytes,
        ),
    )(A_hg, A_wT, xf)

    if P_pad > P:
        out = out[:P]
    return out.reshape(N, C, 2 * H, 2 * W)            # leading-dim reshape, free


# ---------------------------------------------------------------------------
# Pure-JAX reference (mirrors the PyTorch forward) for verification
# ---------------------------------------------------------------------------
def upsample_reference(x, *, filt_size=4, stride=2):
    N, C, H, W = x.shape
    pad_size = (filt_size - 1) // 2
    p = 1 + pad_size
    k = filt_size
    xp = jnp.pad(x, ((0, 0), (0, 0), (1, 1), (1, 1)), mode="edge")
    a = _get_filter_1d(filt_size)
    filt2d = np.outer(a, a)
    filt2d = filt2d / filt2d.sum() * stride ** 2
    # conv_transpose2d(x, w, stride=s, padding=p) ==
    #   correlate(dilate(x, s), flip(w)) with padding (k-1-p).
    w = jnp.asarray(filt2d[::-1, ::-1].copy(), dtype=x.dtype)
    w = jnp.broadcast_to(w[None, None], (C, 1, k, k))
    out = jax.lax.conv_general_dilated(
        xp, w,
        window_strides=(1, 1),
        padding=[(k - 1 - p, k - 1 - p)] * 2,
        lhs_dilation=(stride, stride),
        dimension_numbers=("NCHW", "OIHW", "NCHW"),
        feature_group_count=C,
    )
    out = out[:, :, 1:, 1:]
    if filt_size % 2 == 0:
        out = out[:, :, :-1, :-1]
    return out


if __name__ == "__main__":
    key = jax.random.PRNGKey(0)
    k1, k2 = jax.random.split(key)

    # Main check: module-default shapes (2, 4, 16, 16).
    N, C, H, W = 2, 4, 16, 16
    x = jax.random.normal(k1, (N, C, H, W), dtype=jnp.float32)
    out = jax.block_until_ready(upsample_pallas(x))
    ref = jax.block_until_ready(upsample_reference(x))
    assert out.shape == (N, C, 2 * H, 2 * W), out.shape
    np.testing.assert_allclose(np.asarray(out), np.asarray(ref),
                               rtol=1e-5, atol=2e-5)

    # Secondary check: ragged N*C (padded grid) + multi-group packed H-pass path.
    N2, C2, H2, W2 = 2, 130, 8, 8
    x2 = jax.random.normal(k2, (N2, C2, H2, W2), dtype=jnp.float32)
    out2 = jax.block_until_ready(upsample_pallas(x2))
    ref2 = jax.block_until_ready(upsample_reference(x2))
    np.testing.assert_allclose(np.asarray(out2), np.asarray(ref2),
                               rtol=1e-5, atol=2e-5)

    print("KERNEL_OK")
</pallas_src>

<mosaic_0001>
module attributes {stable_mosaic.version = 11 : i64} {
  func.func @kernel(%arg0: i32, %arg1: memref<64x32xf32, #tpu.memory_space<vmem>>, %arg2: memref<16x32xf32, #tpu.memory_space<vmem>>, %arg3: memref<2x16x16xf32, #tpu.memory_space<vmem>>, %arg4: memref<2x32x32xf32, #tpu.memory_space<vmem>>) attributes {dimension_semantics = [#tpu.dimension_semantics<parallel>], iteration_bounds = array<i64: 4>, scalar_prefetch = 0 : i64, scratch_operands = 0 : i64, tpu.core_type = #tpu.core_type<tc>, window_params = [{pipeline_mode = #tpu.pipeline_mode<synchronous>, transform_indices = @transform_0, window_bounds = array<i64: 64, 32>}, {pipeline_mode = #tpu.pipeline_mode<synchronous>, transform_indices = @transform_1, window_bounds = array<i64: 16, 32>}, {transform_indices = @transform_2, window_bounds = array<i64: 2, 16, 16>}, {transform_indices = @transform_3, window_bounds = array<i64: 2, 32, 32>}]} {
    %c0 = arith.constant 0 : index
    %c0_0 = arith.constant 0 : index
    %0 = vector.load %arg1[%c0, %c0_0] : memref<64x32xf32, #tpu.memory_space<vmem>>, vector<64x32xf32>
    %c0_1 = arith.constant 0 : index
    %c0_2 = arith.constant 0 : index
    %1 = vector.load %arg2[%c0_1, %c0_2] : memref<16x32xf32, #tpu.memory_space<vmem>>, vector<16x32xf32>
    %c0_3 = arith.constant 0 : index
    %c0_4 = arith.constant 0 : index
    %c0_5 = arith.constant 0 : index
    %2 = vector.load %arg3[%c0_3, %c0_4, %c0_5] : memref<2x16x16xf32, #tpu.memory_space<vmem>>, vector<2x16x16xf32>
    %3 = vector.shape_cast %2 : vector<2x16x16xf32> to vector<32x16xf32>
    %cst = arith.constant dense<0.000000e+00> : vector<64x16xf32>
    %4 = tpu.matmul %0, %3, %cst {dimension_numbers = #tpu.dot_dimension_numbers<[1], [0], [0], [1], [0, 0, 1, 1], [], []>} : vector<64x32xf32>, vector<32x16xf32>, vector<64x16xf32> -> vector<64x16xf32>
    %cst_6 = arith.constant dense<0.000000e+00> : vector<64x32xf32>
    %5 = tpu.matmul %4, %1, %cst_6 {dimension_numbers = #tpu.dot_dimension_numbers<[1], [0], [0], [1], [0, 0, 1, 1], [], []>} : vector<64x16xf32>, vector<16x32xf32>, vector<64x32xf32> -> vector<64x32xf32>
    %6 = vector.shape_cast %5 : vector<64x32xf32> to vector<2x32x32xf32>
    %c0_7 = arith.constant 0 : index
    %c0_8 = arith.constant 0 : index
    %c0_9 = arith.constant 0 : index
    %7 = vector.load %arg4[%c0_7, %c0_8, %c0_9] : memref<2x32x32xf32, #tpu.memory_space<vmem>>, vector<2x32x32xf32>
    tpu.vector_store %arg4[%c0_7, %c0_8, %c0_9], %6 {strides = array<i32>} : memref<2x32x32xf32, #tpu.memory_space<vmem>>, vector<2x32x32xf32>,
    return
  }
  func.func @transform_0(%arg0: i32) -> (i32, i32) {
    %c0_i32 = arith.constant 0 : i32
    %c0_i32_0 = arith.constant 0 : i32
    %c0_i32_1 = arith.constant 0 : i32
    return %c0_i32, %c0_i32_0 : i32, i32
  }
  func.func @transform_1(%arg0: i32) -> (i32, i32) {
    %c0_i32 = arith.constant 0 : i32
    %c0_i32_0 = arith.constant 0 : i32
    %c0_i32_1 = arith.constant 0 : i32
    return %c0_i32, %c0_i32_0 : i32, i32
  }
  func.func @transform_2(%arg0: i32) -> (i32, i32, i32) {
    %c0_i32 = arith.constant 0 : i32
    %c0_i32_0 = arith.constant 0 : i32
    %c0_i32_1 = arith.constant 0 : i32
    return %arg0, %c0_i32, %c0_i32_0 : i32, i32, i32
  }
  func.func @transform_3(%arg0: i32) -> (i32, i32, i32) {
    %c0_i32 = arith.constant 0 : i32
    %c0_i32_0 = arith.constant 0 : i32
    %c0_i32_1 = arith.constant 0 : i32
    return %arg0, %c0_i32, %c0_i32_0 : i32, i32, i32
  }
}

</mosaic_0001>

<llo_original>
// kernel: tpu_custom_call.1
$region0: #{tpu_custom_call.1}
  #allocation0 [shape = 'u32[]', space=smem, size = 0x4, offset = 0x4, fixed_abs, tag = 'smem constant byte address 0x4 - core index']
  #allocation1 [shape = 'u32[72,128]{1,0:T(1,128)}', space=vmem, size = 0x9000, scoped, tag = 'internal scratch']
  %s0 = inlined_call_operand.vmem [shape: f32[64,32], index: 0, kind: input, shape index: {}]
  %s1 = inlined_call_operand.vmem [shape: f32[16,32], index: 1, kind: input, shape index: {}]
  %s2 = inlined_call_operand.hbm [shape: f32[8,16,16], index: 2, kind: input, shape index: {}]
  %s3 = inlined_call_operand.hbm [shape: f32[8,32,32], index: 3, kind: output, shape index: {}]
  %s4 = sld [smem:[#allocation0]]
  $region49: #{tpu_custom_call.1} parent=0
    _
  %s6 = ssub.s32 1, %s4
  %s7 = scalar_select 0, %s6, %s4
  $region1: #{tpu_custom_call.1} parent=0
    #allocation2 [shape = 'u8[32768]{0}', space=vmem, size = 0x8000, scoped, tag = 'input window, operand 2']
    #allocation3 [shape = 's32[2]{0}', space=sflag, size = 0x8, scoped, tag = 'scoped memory for tpu_custom_call.1']
    #allocation4 [shape = 's32[2]{0}', space=sflag, size = 0x8, scoped, tag = 'scoped memory for tpu_custom_call.1']
    #allocation5 [shape = 'u8[65536]{0}', space=vmem, size = 0x10000, scoped, tag = 'output window, operand 0']
    %8 = vsyncpa [#allocation3], 0
    %s9 = scalar_lea.sflag [#allocation3], 1
    %10 = vsyncpa %s9, 0
    %11 = vsyncpa [#allocation4], 0
    %s12 = scalar_lea.sflag [#allocation4], 1
    %13 = vsyncpa %s12, 0
    loop: start=0, step=1, limit=6
    $region2: #{tpu_custom_call.1} parent=1 // loop_pre_header
      _
    $region3: #{tpu_custom_call.1} parent=1 // loop_header
      %s15 = sphi 0, %s19
      %p16 = scmp.ge.s32.totalorder %s15, 6
      %s23 = sphi 0, %s23
      %s25 = sphi 0, %s23
      %s26 = sphi 0, %s25
      %s40 = sphi 0, %s26
      %s44 = sphi 0, %s44
      %s46 = sphi 0, %s44
      %s47 = sphi 0, %s46
      %s61 = sphi 0, %s47
      %s67 = sphi 0, %s69
      %s70 = sphi 0, %s67
      %s71 = sphi 0, %s70
      %s87 = sphi 0, %s71
      %s93 = sphi 0, %s95
      %s96 = sphi 0, %s93
      %s97 = sphi 0, %s96
      %s113 = sphi 0, %s97
    $region4: #{tpu_custom_call.1} parent=1 // loop_header_branch
      %18 = sbr.rel (%p16) target = $region8
    $region5: #{tpu_custom_call.1} parent=1 // loop_body
      %s20 = ssub.s32 %s15, 1
      %s21 = ssub.s32 %s15, 2
      %s22 = sadd.s32 %s15, 1
      %s24 = sadd.s32 %s23, 1
      %p27 = scmp.eq.s32.totalorder %s15, 3
      %p28 = scmp.ne.s32.totalorder %s23, %s25
      %p29 = scmp.eq.s32.totalorder %s15, 0
      %p30 = por %p28, %p29
      %p31 = scmp.ne.s32.totalorder %s23, %s25
      %p32 = scmp.eq.s32.totalorder %s20, 3
      %p33 = por %p31, %p32
      %p34 = scmp.ne.s32.totalorder %s25, %s26
      %p35 = scmp.eq.s32.totalorder %s20, 0
      %p36 = por %p34, %p35
      %p37 = scmp.ne.s32.totalorder %s25, %s26
      %p38 = scmp.eq.s32.totalorder %s21, 3
      %p39 = por %p37, %p38
      %p41 = scmp.ne.s32.totalorder %s26, %s40
      %p42 = scmp.eq.s32.totalorder %s21, 0
      %p43 = por %p41, %p42
      %s45 = sadd.s32 %s44, 1
      %p48 = scmp.eq.s32.totalorder %s15, 3
      %p49 = scmp.ne.s32.totalorder %s44, %s46
      %p50 = scmp.eq.s32.totalorder %s15, 0
      %p51 = por %p49, %p50
      %p52 = scmp.ne.s32.totalorder %s44, %s46
      %p53 = scmp.eq.s32.totalorder %s20, 3
      %p54 = por %p52, %p53
      %p55 = scmp.ne.s32.totalorder %s46, %s47
      %p56 = scmp.eq.s32.totalorder %s20, 0
      %p57 = por %p55, %p56
      %p58 = scmp.ne.s32.totalorder %s46, %s47
      %p59 = scmp.eq.s32.totalorder %s21, 3
      %p60 = por %p58, %p59
      %p62 = scmp.ne.s32.totalorder %s47, %s61
      %p63 = scmp.eq.s32.totalorder %s21, 0
      %p64 = por %p62, %p63
      %s65 = ssub.s32 %s15, %s22
      %p66 = scmp.eq.s32.totalorder %s65, 0
      %s68 = sadd.s32 %s67, 1
      %s69 = scalar_select %p66, %s67, %s68
      %p72 = pneg %p66
      %p73 = scmp.eq.s32.totalorder %s15, 3
      %p74 = por %p72, %p73
      %p75 = scmp.ne.s32.totalorder %s67, %s70
      %p76 = scmp.eq.s32.totalorder %s15, 0
      %p77 = por %p75, %p76
      %p78 = scmp.ne.s32.totalorder %s67, %s70
      %p79 = scmp.eq.s32.totalorder %s20, 3
      %p80 = por %p78, %p79
      %p81 = scmp.ne.s32.totalorder %s70, %s71
      %p82 = scmp.eq.s32.totalorder %s20, 0
      %p83 = por %p81, %p82
      %p84 = scmp.ne.s32.totalorder %s70, %s71
      %p85 = scmp.eq.s32.totalorder %s21, 3
      %p86 = por %p84, %p85
      %p88 = scmp.ne.s32.totalorder %s71, %s87
      %p89 = scmp.eq.s32.totalorder %s21, 0
      %p90 = por %p88, %p89
      %s91 = ssub.s32 %s15, %s22
      %p92 = scmp.eq.s32.totalorder %s91, 0
      %s94 = sadd.s32 %s93, 1
      %s95 = scalar_select %p92, %s93, %s94
      %p98 = pneg %p92
      %p99 = scmp.eq.s32.totalorder %s15, 3
      %p100 = por %p98, %p99
      %p101 = scmp.ne.s32.totalorder %s93, %s96
      %p102 = scmp.eq.s32.totalorder %s15, 0
      %p103 = por %p101, %p102
      %p104 = scmp.ne.s32.totalorder %s93, %s96
      %p105 = scmp.eq.s32.totalorder %s20, 3
      %p106 = por %p104, %p105
      %p107 = scmp.ne.s32.totalorder %s96, %s97
      %p108 = scmp.eq.s32.totalorder %s20, 0
      %p109 = por %p107, %p108
      %p110 = scmp.ne.s32.totalorder %s96, %s97
      %p111 = scmp.eq.s32.totalorder %s21, 3
      %p112 = por %p110, %p111
      %p114 = scmp.ne.s32.totalorder %s97, %s113
      %p115 = scmp.eq.s32.totalorder %s21, 0
      %p116 = por %p114, %p115
      %p117 = scmp.le.s32.totalorder 1, %s15
      %p118 = scmp.lt.s32.totalorder %s15, 5
      %p119 = pnand %p117, %p118
      %p120 = pneg %p119
      // Predicated region
      $region9: #{tpu_custom_call.1} parent=5 // pred_check
        _
      $region10: #{tpu_custom_call.1} parent=5 // pred_check_branch
        %122 = sbr.rel (%p119) target = $region12
      $region11: #{tpu_custom_call.1} parent=5 // pred_region
        %s123 = ssub.s32 %s15, 1
        // Predicated region
        $region13: #{tpu_custom_call.1} parent=11 // pred_check
          %p124 = pneg %p36
        $region14: #{tpu_custom_call.1} parent=11 // pred_check_branch
          %126 = sbr.rel (%p124) target = $region16
        $region15: #{tpu_custom_call.1} parent=11 // pred_region
          _
        $region16: #{tpu_custom_call.1} parent=11 // pred_fallthru
          _
        // Predicated region
        $region17: #{tpu_custom_call.1} parent=11 // pred_check
          %p127 = pneg %p57
        $region18: #{tpu_custom_call.1} parent=11 // pred_check_branch
          %129 = sbr.rel (%p127) target = $region20
        $region19: #{tpu_custom_call.1} parent=11 // pred_region
          _
        $region20: #{tpu_custom_call.1} parent=11 // pred_fallthru
          _
      $region12: #{tpu_custom_call.1} parent=5 // pred_fallthru
        _
      %p130 = scmp.lt.s32.totalorder %s15, 4
      // Predicated region
      $region21: #{tpu_custom_call.1} parent=5 // pred_check
        %p131 = pneg %p130
      $region22: #{tpu_custom_call.1} parent=5 // pred_check_branch
        %133 = sbr.rel (%p131) target = $region24
      $region23: #{tpu_custom_call.1} parent=5 // pred_region
        // Predicated region
        $region25: #{tpu_custom_call.1} parent=23 // pred_check
          %p134 = pneg %p77
        $region26: #{tpu_custom_call.1} parent=23 // pred_check_branch
          %136 = sbr.rel (%p134) target = $region28
        $region27: #{tpu_custom_call.1} parent=23 // pred_region
          %s137 = sand.u32 %s67, 1
          %s138 = scalar_lea.sflag [#allocation3], %s137
          %s139 = sand.u32 %s67, 1
          %s140 = smul.addr %s139, 32
          %s141 = scalar_lea.vmem [#allocation2], %s140
          %s142 = smul.u32 2, %s15
          %144 = vsyncadd %s138, 0
          %s145 = smul.addr %s142, 2
          %s146 = smul.addr %s145, 8
          %s147 = scalar_lea.hbm %s2, %s146
          %s148 = sshll.u32 %s147, 4
          %s149 = int_to_ptr.hbm [resolvable:$true] %s148
          %s150 = sshll.u32 %s141, 4
          %s151 = int_to_ptr.vmem [resolvable:$true] %s150
          %156 = dma.hbm_to_vmem [thread:$0]  %s149, 512, %s151, %s138, 128, 128, 8
        $region28: #{tpu_custom_call.1} parent=23 // pred_fallthru
          _
      $region24: #{tpu_custom_call.1} parent=5 // pred_fallthru
        _
      %p157 = scmp.le.s32.totalorder 1, %s15
      %p158 = scmp.lt.s32.totalorder %s15, 5
      %p159 = pnand %p157, %p158
      %p160 = pneg %p159
      // Predicated region
      $region29: #{tpu_custom_call.1} parent=5 // pred_check
        _
      $region30: #{tpu_custom_call.1} parent=5 // pred_check_branch
        %162 = sbr.rel (%p159) target = $region32
      $region31: #{tpu_custom_call.1} parent=5 // pred_region
        %s163 = ssub.s32 %s15, 1
        %s164 = sand.u32 %s70, 1
        %s165 = scalar_lea.sflag [#allocation3], %s164
        %s166 = sand.u32 %s70, 1
        %s167 = smul.addr %s166, 32
        %s168 = scalar_lea.vmem [#allocation2], %s167
        // Predicated region
        $region33: #{tpu_custom_call.1} parent=31 // pred_check
          %p169 = pneg %p83
        $region34: #{tpu_custom_call.1} parent=31 // pred_check_branch
          %171 = sbr.rel (%p169) target = $region36
        $region35: #{tpu_custom_call.1} parent=31 // pred_region
          %173 = dma.done %s165, 512
        $region36: #{tpu_custom_call.1} parent=31 // pred_fallthru
          _
        %p174 = pneg %p36
        %p175 = pneg %p33
        %p176 = pneg %p57
        %p177 = pneg %p54
        %s178 = sand.u32 %s70, 1
        %s179 = scalar_lea.sflag [#allocation3], %s178
        %s180 = sand.u32 %s70, 1
        %s181 = smul.addr %s180, 32
        %s182 = scalar_lea.vmem [#allocation2], %s181
        %p183 = pneg %p83
        %p184 = pneg %p80
        %p185 = pneg %p109
        %p186 = pneg %p106
        %s187 = sand.u32 %s96, 1
        %s188 = scalar_lea.sflag [#allocation4], %s187
        %s189 = sand.u32 %s96, 1
        %s190 = smul.addr %s189, 64
        %s191 = scalar_lea.vmem [#allocation5], %s190
        %s192 = smul.u32 2, %s20
        %s193 = smul.u32 2, %s20
        %v194 = vld [vmem:[%s0] sm:$0xff]
        %v195 = vld [vmem:[%s0 + $0x8] sm:$0xff]
        %v196 = vld [vmem:[%s0 + $0x10] sm:$0xff]
        %v197 = vld [vmem:[%s0 + $0x18] sm:$0xff]
        %v198 = vld [vmem:[%s0 + $0x20] sm:$0xff]
        %v199 = vld [vmem:[%s0 + $0x28] sm:$0xff]
        %v200 = vld [vmem:[%s0 + $0x30] sm:$0xff]
        %v201 = vld [vmem:[%s0 + $0x38] sm:$0xff]
        %v202 = vld [vmem:[%s1] sm:$0xff]
        %v203 = vld [vmem:[%s1 + $0x8] sm:$0xff]
        %v204 = vld [vmem:[%s168] sm:$0xff]
        %v205 = vld [vmem:[%s168 + $0x8] sm:$0xff]
        %v206 = vld [vmem:[%s168 + $0x10] sm:$0xff]
        %v207 = vld [vmem:[%s168 + $0x18] sm:$0xff]
        %vm208 = vcmask 261120
        %v210 = vsel %vm208, %v194, 0
        %v213 = vsel %vm208, %v195, 0
        %v216 = vsel %vm208, %v196, 0
        %v219 = vsel %vm208, %v197, 0
        %v222 = vsel %vm208, %v198, 0
        %v225 = vsel %vm208, %v199, 0
        %v228 = vsel %vm208, %v200, 0
        %v231 = vsel %vm208, %v201, 0
        %233 = vmatpush.msra.mxu0 0.0
        %234 = vmatpush.msra.mxu0 0.0
        %235 = vmatpush.msra.mxu0 0.0
        %236 = vmatpush.msra.mxu0 0.0
        %237 = vmatpush.msra.mxu0 0.0
        %238 = vmatpush.msra.mxu0 0.0
        %239 = vmatpush.msra.mxu0 0.0
        %240 = vmatpush.msra.mxu0 0.0
        %241 = vmatpush.msra.mxu0 0.0
        %242 = vmatpush.msra.mxu0 0.0
        %243 = vmatpush.msra.mxu0 0.0
        %244 = vmatpush.msra.mxu0 0.0
        %245 = vmatpush.msra.mxu0 %v207
        %246 = vmatpush.msra.mxu0 %v206
        %247 = vmatpush.msra.mxu0 %v205
        %248 = vmatpush.msra.mxu0 %v204
        %249 = vmatmul.f32.gmra.mxu0 %v210
        %v250 = vpop.f32.mrf.mxu0
        %v251 = vadd.f32 0.0, %v250
        %252 = vmatmul.f32.gmra.mxu0 %v213
        %v253 = vpop.f32.mrf.mxu0
        %v254 = vadd.f32 0.0, %v253
        %255 = vmatmul.f32.gmra.mxu0 %v216
        %v256 = vpop.f32.mrf.mxu0
        %v257 = vadd.f32 0.0, %v256
        %258 = vmatmul.f32.gmra.mxu0 %v219
        %v259 = vpop.f32.mrf.mxu0
        %v260 = vadd.f32 0.0, %v259
        %261 = vmatmul.f32.gmra.mxu0 %v222
        %v262 = vpop.f32.mrf.mxu0
        %v263 = vadd.f32 0.0, %v262
        %264 = vmatmul.f32.gmra.mxu0 %v225
        %v265 = vpop.f32.mrf.mxu0
        %v266 = vadd.f32 0.0, %v265
        %267 = vmatmul.f32.gmra.mxu0 %v228
        %v268 = vpop.f32.mrf.mxu0
        %v269 = vadd.f32 0.0, %v268
        %270 = vmatmul.f32.gmra.mxu0 %v231
        %v271 = vpop.f32.mrf.mxu0
        %v272 = vadd.f32 0.0, %v271
        %273 = vdwg.mxu0
        %vm274 = vcmask 130048
        %v276 = vsel %vm274, %v251, 0
        %v279 = vsel %vm274, %v254, 0
        %v282 = vsel %vm274, %v257, 0
        %v285 = vsel %vm274, %v260, 0
        %v288 = vsel %vm274, %v263, 0
        %v291 = vsel %vm274, %v266, 0
        %v294 = vsel %vm274, %v269, 0
        %v297 = vsel %vm274, %v272, 0
        %299 = vmatpush.msra.mxu0 0.0
        %300 = vmatpush.msra.mxu0 0.0
        %301 = vmatpush.msra.mxu0 0.0
        %302 = vmatpush.msra.mxu0 0.0
        %303 = vmatpush.msra.mxu0 0.0
        %304 = vmatpush.msra.mxu0 0.0
        %305 = vmatpush.msra.mxu0 0.0
        %306 = vmatpush.msra.mxu0 0.0
        %307 = vmatpush.msra.mxu0 0.0
        %308 = vmatpush.msra.mxu0 0.0
        %309 = vmatpush.msra.mxu0 0.0
        %310 = vmatpush.msra.mxu0 0.0
        %311 = vmatpush.msra.mxu0 0.0
        %312 = vmatpush.msra.mxu0 0.0
        %313 = vmatpush.msra.mxu0 %v203
        %314 = vmatpush.msra.mxu0 %v202
        %315 = vmatmul.f32.gmra.mxu0 %v276
        %v316 = vpop.f32.mrf.mxu0
        %v317 = vadd.f32 0.0, %v316
        %318 = vmatmul.f32.gmra.mxu0 %v279
        %v319 = vpop.f32.mrf.mxu0
        %v320 = vadd.f32 0.0, %v319
        %321 = vmatmul.f32.gmra.mxu0 %v282
        %v322 = vpop.f32.mrf.mxu0
        %v323 = vadd.f32 0.0, %v322
        %324 = vmatmul.f32.gmra.mxu0 %v285
        %v325 = vpop.f32.mrf.mxu0
        %v326 = vadd.f32 0.0, %v325
        %327 = vmatmul.f32.gmra.mxu0 %v288
        %v328 = vpop.f32.mrf.mxu0
        %v329 = vadd.f32 0.0, %v328
        %330 = vmatmul.f32.gmra.mxu0 %v291
        %v331 = vpop.f32.mrf.mxu0
        %v332 = vadd.f32 0.0, %v331
        %333 = vmatmul.f32.gmra.mxu0 %v294
        %v334 = vpop.f32.mrf.mxu0
        %v335 = vadd.f32 0.0, %v334
        %336 = vmatmul.f32.gmra.mxu0 %v297
        %v337 = vpop.f32.mrf.mxu0
        %v338 = vadd.f32 0.0, %v337
        %339 = vdwg.mxu0
        %340 = vst.msk [vmem:[%s191] sm:$0xff] %vm208, %v317
        %341 = vst.msk [vmem:[%s191 + $0x8] sm:$0xff] %vm208, %v320
        %342 = vst.msk [vmem:[%s191 + $0x10] sm:$0xff] %vm208, %v323
        %343 = vst.msk [vmem:[%s191 + $0x18] sm:$0xff] %vm208, %v326
        %344 = vst.msk [vmem:[%s191 + $0x20] sm:$0xff] %vm208, %v329
        %345 = vst.msk [vmem:[%s191 + $0x28] sm:$0xff] %vm208, %v332
        %346 = vst.msk [vmem:[%s191 + $0x30] sm:$0xff] %vm208, %v335
        %347 = vst.msk [vmem:[%s191 + $0x38] sm:$0xff] %vm208, %v338
        %s348 = sand.u32 %s96, 1
        %s349 = scalar_lea.sflag [#allocation4], %s348
        %s350 = sand.u32 %s96, 1
        %s351 = smul.addr %s350, 64
        %s352 = scalar_lea.vmem [#allocation5], %s351
        // Predicated region
        $region37: #{tpu_custom_call.1} parent=31 // pred_check
          %p353 = pneg %p106
        $region38: #{tpu_custom_call.1} parent=31 // pred_check_branch
          %355 = sbr.rel (%p353) target = $region40
        $region39: #{tpu_custom_call.1} parent=31 // pred_region
          %s356 = smul.u32 2, %s20
          %358 = vsyncadd %s349, 0
          %s359 = smul.addr %s356, 4
          %s360 = smul.addr %s359, 8
          %s361 = scalar_lea.hbm %s3, %s360
          %s362 = sshll.u32 %s352, 4
          %s363 = int_to_ptr.vmem [resolvable:$true] %s362
          %s364 = sshll.u32 %s361, 4
          %s365 = int_to_ptr.hbm [resolvable:$true] %s364
          %370 = dma.vmem_to_hbm [thread:$0]  %s363, 1024, %s365, %s349, 128, 128, 8
        $region40: #{tpu_custom_call.1} parent=31 // pred_fallthru
          _
      $region32: #{tpu_custom_call.1} parent=5 // pred_fallthru
        _
      %p371 = scmp.le.s32.totalorder 2, %s15
      // Predicated region
      $region41: #{tpu_custom_call.1} parent=5 // pred_check
        %p372 = pneg %p371
      $region42: #{tpu_custom_call.1} parent=5 // pred_check_branch
        %374 = sbr.rel (%p372) target = $region44
      $region43: #{tpu_custom_call.1} parent=5 // pred_region
        %s375 = ssub.s32 %s15, 2
        // Predicated region
        $region45: #{tpu_custom_call.1} parent=43 // pred_check
          %p376 = pneg %p112
        $region46: #{tpu_custom_call.1} parent=43 // pred_check_branch
          %378 = sbr.rel (%p376) target = $region48
        $region47: #{tpu_custom_call.1} parent=43 // pred_region
          %s379 = sand.u32 %s97, 1
          %s380 = scalar_lea.sflag [#allocation4], %s379
          %s381 = sand.u32 %s97, 1
          %s382 = smul.addr %s381, 64
          %s383 = scalar_lea.vmem [#allocation5], %s382
          %385 = dma.done %s380, 1024
        $region48: #{tpu_custom_call.1} parent=43 // pred_fallthru
          _
      $region44: #{tpu_custom_call.1} parent=5 // pred_fallthru
        _
    $region6: #{tpu_custom_call.1} parent=1 // loop_footer
      %s19 = sadd.s32 1, %s15
    $region7: #{tpu_custom_call.1} parent=1 // loop_footer_branch
      %14 = sbr.rel target = $region3
    $region8: #{tpu_custom_call.1} parent=1 // loop_exit
      _
    %386 = vsyncpa [#allocation3], 1
    %s387 = scalar_lea.sflag [#allocation3], 1
    %388 = vsyncpa %s387, 1
    %389 = vsyncpa [#allocation4], 1
    %s390 = scalar_lea.sflag [#allocation4], 1
    %391 = vsyncpa %s390, 1

</llo_original>
